<compile_context>
chip_gen: v6e
topology: v6e:2x2x1
jax: 0.10.0
libtpu: 0.0.40
codegen_flags: <defaults>
</compile_context>

<pallas_src>
import jax
import jax.numpy as jnp
from jax import lax
from jax.experimental import pallas as pl
from jax.experimental.pallas import tpu as pltpu


def _make_sse_kernel(n_rows, tm, group, use_weight):
    """Row-block weighted-SSE kernel builder.

    Grid step (c, k) owns row-block  blk = c * num_programs(1) + k  of the
    flattened (N, HW) inputs and accumulates sum(((hm - gt) * w)^2) over its
    valid rows into the per-core (8, HW) f32 accumulator out_ref.  The
    sublane-grouped reduction is pure VPU work; the tiny cross-sublane/lane
    final sum happens in the JAX wrapper.
    """
    n_groups = tm // group
    unroll = n_groups <= 8

    def kernel(*refs):
        if use_weight:
            hm_ref, gt_ref, w_ref, out_ref = refs
        else:
            hm_ref, gt_ref, out_ref = refs
        hw = hm_ref.shape[1]
        k = pl.program_id(1)
        row0 = (pl.program_id(0) * pl.num_programs(1) + k) * tm

        @pl.when(k == 0)
        def _init():
            out_ref[...] = jnp.zeros_like(out_ref)

        # Skip blocks that lie entirely past the data (clamped duplicates that
        # only exist to make the per-core grid rectangular).
        @pl.when(row0 < n_rows)
        def _accumulate():
            def body(g, acc):
                base = pl.multiple_of(g * group, 8)
                hm = hm_ref[pl.ds(base, group), :].astype(jnp.float32)
                gt = gt_ref[pl.ds(base, group), :].astype(jnp.float32)
                d = hm - gt
                if use_weight:
                    d = d * w_ref[pl.ds(base, group), :].astype(jnp.float32)
                # Tail-row mask: with no wrapper-side jnp.pad, OOB rows of a
                # partial block hold unspecified data (possibly NaN/Inf), so
                # select 0 for them AFTER the arithmetic (where, not multiply).
                rid = row0 + base + lax.broadcasted_iota(jnp.int32, (group, 1), 0)
                sq = jnp.where(rid < n_rows, jnp.square(d), 0.0)
                # (group, HW) -> (group//8, 8, HW): sublane-aligned split; the
                # axis-0 sum is plain VPU vreg adds (no XLU, no scalar RMW).
                return acc + jnp.sum(sq.reshape(group // 8, 8, hw), axis=0)

            acc = lax.fori_loop(0, n_groups, body,
                                jnp.zeros((8, hw), jnp.float32), unroll=unroll)
            out_ref[...] += acc.reshape(1, 8, hw)

    return kernel


def _choose_tiling(n_rows, hw, in_itemsize, tile_target_bytes, block_rows=None,
                   group_f32_budget=1 << 20):
    """Pick (TM rows per grid step, GROUP rows per inner-loop step)."""
    n_ceil8 = -(-n_rows // 8) * 8
    # GROUP bounds the in-kernel f32 temps (diff / square) regardless of TM.
    group = max(8, min((group_f32_budget // max(1, hw * 4)) // 8 * 8, 512, n_ceil8))
    if block_rows is not None:
        tm = max(8, (int(block_rows) // 8) * 8)
        if tm % group != 0:
            group = 8          # 8 always divides tm
        return tm, group
    # One streamed input tile ~= tile_target_bytes (bigger tiles amortize the
    # fixed per-grid-step overhead); never larger than the (8-padded) data, so
    # awkward N can no longer push us into a tiny-tile regime.
    groups_per_tile = max(1, tile_target_bytes // max(1, group * hw * in_itemsize))
    groups_per_tile = min(groups_per_tile, -(-n_ceil8 // group))
    return group * groups_per_tile, group


def heatmap_mse_loss(heatmap, target, target_weight=None, use_target_weight=True,
                     block_rows=None, tile_target_bytes=4 << 20, core_split=2):
    """heatmap, target: (B, J, H, W); target_weight: (B, J, 1) or (B, J)."""
    B, J, H, W = heatmap.shape
    HW = H * W
    N = B * J

    # Zero-copy flatten of contiguous NCHW — no HBM transpose, no jnp.pad.
    hm = heatmap.reshape(N, HW)
    gt = target.reshape(N, HW)
    # TODO(synk): if HW is not a multiple of 128 (e.g. 56x56) loads/stores use
    # masked lane groups; common pose sizes (64x48, 64x64, 96x72, 16x16) are fine.

    in_itemsize = max(jnp.dtype(hm.dtype).itemsize, jnp.dtype(gt.dtype).itemsize)
    TM, GROUP = _choose_tiling(N, HW, in_itemsize, tile_target_bytes, block_rows)

    num_blocks = pl.cdiv(N, TM)
    n_cores = core_split if num_blocks >= core_split else 1
    bpc = pl.cdiv(num_blocks, n_cores)          # row-blocks per core
    last_block = num_blocks - 1

    def _row_map(c, k):
        # Clamp so the (rare) per-core padding block never requests a fully
        # out-of-range window; the kernel masks its contribution to zero.
        return (jnp.minimum(c * bpc + k, last_block), 0)

    in_arrays = [hm, gt]
    in_specs = [
        pl.BlockSpec((TM, HW), _row_map),
        pl.BlockSpec((TM, HW), _row_map),
    ]

    if use_target_weight:
        if target_weight is None:
            raise ValueError("target_weight is required when use_target_weight=True")
        tw = jnp.reshape(target_weight, (B, J, -1))
        if tw.shape[-1] != 1:
            raise ValueError("target_weight must carry one scalar per (batch, joint)")
        in_arrays.append(tw.reshape(N, 1))
        in_specs.append(pl.BlockSpec((TM, 1), _row_map))

    kernel = _make_sse_kernel(N, TM, GROUP, use_target_weight)

    tile_in_bytes = TM * HW * in_itemsize
    vmem_limit = int(min(64 << 20,
                         max(32 << 20,
                             4 * tile_in_bytes + 6 * GROUP * HW * 4 + (8 << 20))))

    partials = pl.pallas_call(
        kernel,
        out_shape=jax.ShapeDtypeStruct((n_cores, 8, HW), jnp.float32),
        grid_spec=pltpu.PrefetchScalarGridSpec(
            num_scalar_prefetch=0,
            grid=(n_cores, bpc),
            in_specs=in_specs,
            # One resident (8, HW) accumulator block per core; constant index
            # over the reduction ("arbitrary") axis.
            out_specs=pl.BlockSpec((1, 8, HW), lambda c, k: (c, 0, 0)),
        ),
        compiler_params=pltpu.CompilerParams(
            dimension_semantics=("parallel", "arbitrary"),
            vmem_limit_bytes=vmem_limit,
        ),
    )(*in_arrays)

    # Tiny final cross-sublane/lane reduce + scale in plain JAX.
    denom = float(J) * float(B) * float(HW)
    return jnp.sum(partials) * (1.0 / denom)


def _reference_loss(heatmap, target, target_weight, use_target_weight=True):
    """Pure-JAX reference mirroring the PyTorch forward exactly."""
    B, J, H, W = heatmap.shape
    pred = heatmap.reshape(B, J, -1).astype(jnp.float32)
    gt = target.reshape(B, J, -1).astype(jnp.float32)
    tw = target_weight.reshape(B, J, 1).astype(jnp.float32)
    loss = 0.0
    for idx in range(J):
        p = pred[:, idx]
        g = gt[:, idx]
        if use_target_weight:
            wj = tw[:, idx]  # (B, 1)
            loss += jnp.mean((p * wj - g * wj) ** 2)
        else:
            loss += jnp.mean((p - g) ** 2)
    return loss / J


if __name__ == "__main__":
    # Module has no learned parameters; nothing to initialize beyond inputs.
    B, J, H, W = 2, 4, 16, 16
    key = jax.random.PRNGKey(0)
    k1, k2, k3 = jax.random.split(key, 3)
    heatmap = jax.random.normal(k1, (B, J, H, W), dtype=jnp.float32)
    target = jax.random.normal(k2, (B, J, H, W), dtype=jnp.float32)
    target_weight = jax.random.uniform(k3, (B, J, 1), dtype=jnp.float32)

    # Weighted path (default config).
    loss = jax.block_until_ready(
        heatmap_mse_loss(heatmap, target, target_weight, use_target_weight=True))
    ref = jax.block_until_ready(
        _reference_loss(heatmap, target, target_weight, use_target_weight=True))
    assert jnp.allclose(loss, ref, rtol=1e-5, atol=1e-6), (loss, ref)

    # Unweighted variant (no weight stream).
    loss_nw = jax.block_until_ready(
        heatmap_mse_loss(heatmap, target, None, use_target_weight=False))
    ref_nw = jax.block_until_ready(
        _reference_loss(heatmap, target, target_weight, use_target_weight=False))
    assert jnp.allclose(loss_nw, ref_nw, rtol=1e-5, atol=1e-6), (loss_nw, ref_nw)

    # Multi-block + tail-mask + 2-core-split path (N = 21, not a multiple of 8,
    # small forced tile -> grid (2, 2) with one clamped duplicate block).
    B2, J2 = 3, 7
    k4, k5, k6 = jax.random.split(jax.random.PRNGKey(1), 3)
    hm2 = jax.random.normal(k4, (B2, J2, H, W), dtype=jnp.float32)
    gt2 = jax.random.normal(k5, (B2, J2, H, W), dtype=jnp.float32)
    tw2 = jax.random.uniform(k6, (B2, J2, 1), dtype=jnp.float32)
    loss2 = jax.block_until_ready(
        heatmap_mse_loss(hm2, gt2, tw2, use_target_weight=True, block_rows=8))
    ref2 = jax.block_until_ready(_reference_loss(hm2, gt2, tw2, use_target_weight=True))
    assert jnp.allclose(loss2, ref2, rtol=1e-5, atol=1e-6), (loss2, ref2)

    # Same awkward shape through the default (auto) tiling path.
    loss3 = jax.block_until_ready(
        heatmap_mse_loss(hm2, gt2, tw2, use_target_weight=True))
    assert jnp.allclose(loss3, ref2, rtol=1e-5, atol=1e-6), (loss3, ref2)

    print("KERNEL_OK")
</pallas_src>

<mosaic_0001>
module attributes {stable_mosaic.version = 11 : i64} {
  func.func @kernel(%arg0: i32, %arg1: i32, %arg2: memref<8x256xf32, #tpu.memory_space<vmem>>, %arg3: memref<8x256xf32, #tpu.memory_space<vmem>>, %arg4: memref<8x1xf32, #tpu.memory_space<vmem>>, %arg5: memref<1x8x256xf32, #tpu.memory_space<vmem>>) attributes {dimension_semantics = [#tpu.dimension_semantics<parallel>, #tpu.dimension_semantics<arbitrary>], iteration_bounds = array<i64: 1, 1>, scalar_prefetch = 0 : i64, scratch_operands = 0 : i64, tpu.core_type = #tpu.core_type<tc>, window_params = [{transform_indices = @transform_0, window_bounds = array<i64: 8, 256>}, {transform_indices = @transform_1, window_bounds = array<i64: 8, 256>}, {transform_indices = @transform_2, window_bounds = array<i64: 8, 1>}, {transform_indices = @transform_3, window_bounds = array<i64: 1, 8, 256>}]} {
    %c1_i32 = arith.constant 1 : i32
    %0 = arith.muli %arg0, %c1_i32 : i32
    %1 = arith.addi %0, %arg1 : i32
    %c8_i32 = arith.constant 8 : i32
    %2 = arith.muli %1, %c8_i32 : i32
    %c0_i32 = arith.constant 0 : i32
    %3 = arith.cmpi eq, %arg1, %c0_i32 : i32
    %4 = arith.extui %3 : i1 to i32
    %c0_i32_0 = arith.constant 0 : i32
    %5 = arith.cmpi ne, %4, %c0_i32_0 : i32
    scf.if %5 {
      %cst = arith.constant 0.000000e+00 : f32
      %9 = vector.broadcast %cst : f32 to vector<1x8x256xf32>
      %c0 = arith.constant 0 : index
      %c0_3 = arith.constant 0 : index
      %c0_4 = arith.constant 0 : index
      %10 = vector.load %arg5[%c0, %c0_3, %c0_4] : memref<1x8x256xf32, #tpu.memory_space<vmem>>, vector<1x8x256xf32>
      tpu.vector_store %arg5[%c0, %c0_3, %c0_4], %9 {strides = array<i32>} : memref<1x8x256xf32, #tpu.memory_space<vmem>>, vector<1x8x256xf32>,
    } else {
    }
    %c8_i32_1 = arith.constant 8 : i32
    %6 = arith.cmpi slt, %2, %c8_i32_1 : i32
    %7 = arith.extui %6 : i1 to i32
    %c0_i32_2 = arith.constant 0 : i32
    %8 = arith.cmpi ne, %7, %c0_i32_2 : i32
    scf.if %8 {
      %cst = arith.constant 0.000000e+00 : f32
      %9 = vector.broadcast %cst : f32 to vector<8x256xf32>
      %c0_i32_3 = arith.constant 0 : i32
      %c8_i32_4 = arith.constant 8 : i32
      %10 = arith.muli %c0_i32_3, %c8_i32_4 : i32
      %11 = tpu.assume_multiple %10, 8 : i32
      %12 = arith.index_cast %11 : i32 to index
      %c0 = arith.constant 0 : index
      %13 = vector.load %arg2[%12, %c0] : memref<8x256xf32, #tpu.memory_space<vmem>>, vector<8x256xf32>
      %14 = arith.index_cast %11 : i32 to index
      %c0_5 = arith.constant 0 : index
      %15 = vector.load %arg3[%14, %c0_5] : memref<8x256xf32, #tpu.memory_space<vmem>>, vector<8x256xf32>
      %16 = arith.subf %13, %15 : vector<8x256xf32>
      %17 = arith.index_cast %11 : i32 to index
      %c0_6 = arith.constant 0 : index
      %18 = vector.load %arg4[%17, %c0_6] : memref<8x1xf32, #tpu.memory_space<vmem>>, vector<8x1xf32>
      %19 = vector.broadcast %18 : vector<8x1xf32> to vector<8x256xf32>
      %20 = arith.mulf %16, %19 : vector<8x256xf32>
      %21 = arith.addi %2, %11 : i32
      %22 = tpu.iota {dimensions = array<i32: 0>} : vector<8x1xi32>
      %23 = vector.broadcast %21 : i32 to vector<8x1xi32>
      %24 = arith.addi %23, %22 : vector<8x1xi32>
      %c8_i32_7 = arith.constant 8 : i32
      %25 = vector.broadcast %c8_i32_7 : i32 to vector<8x1xi32>
      %26 = arith.cmpi slt, %24, %25 : vector<8x1xi32>
      %27 = arith.mulf %20, %20 : vector<8x256xf32>
      %cst_8 = arith.constant 0.000000e+00 : f32
      %28 = vector.shape_cast %26 : vector<8x1xi1> to vector<8x1xi1>
      %29 = vector.broadcast %28 : vector<8x1xi1> to vector<8x256xi1>
      %30 = vector.broadcast %cst_8 : f32 to vector<8x256xf32>
      %31 = arith.select %29, %27, %30 : vector<8x256xi1>, vector<8x256xf32>
      %32 = vector.shape_cast %31 : vector<8x256xf32> to vector<1x8x256xf32>
      %cst_9 = arith.constant dense<0.000000e+00> : vector<8x256xf32>
      %33 = vector.multi_reduction <add>, %32, %cst_9 [0] : vector<1x8x256xf32> to vector<8x256xf32>
      %34 = arith.addf %9, %33 : vector<8x256xf32>
      %c1_i32_10 = arith.constant 1 : i32
      %c0_11 = arith.constant 0 : index
      %c0_12 = arith.constant 0 : index
      %c0_13 = arith.constant 0 : index
      %35 = vector.load %arg5[%c0_11, %c0_12, %c0_13] : memref<1x8x256xf32, #tpu.memory_space<vmem>>, vector<1x8x256xf32>
      %36 = vector.shape_cast %34 : vector<8x256xf32> to vector<1x8x256xf32>
      %37 = arith.addf %35, %36 : vector<1x8x256xf32>
      %c0_14 = arith.constant 0 : index
      %c0_15 = arith.constant 0 : index
      %c0_16 = arith.constant 0 : index
      %38 = vector.load %arg5[%c0_14, %c0_15, %c0_16] : memref<1x8x256xf32, #tpu.memory_space<vmem>>, vector<1x8x256xf32>
      tpu.vector_store %arg5[%c0_14, %c0_15, %c0_16], %37 {strides = array<i32>} : memref<1x8x256xf32, #tpu.memory_space<vmem>>, vector<1x8x256xf32>,
    } else {
    }
    return
  }
  func.func @transform_0(%arg0: i32, %arg1: i32) -> (i32, i32) {
    %c1_i32 = arith.constant 1 : i32
    %0 = arith.muli %arg0, %c1_i32 : i32
    %1 = arith.addi %0, %arg1 : i32
    %c0_i32 = arith.constant 0 : i32
    %2 = arith.minsi %1, %c0_i32 : i32
    %c0_i32_0 = arith.constant 0 : i32
    %c0_i32_1 = arith.constant 0 : i32
    return %2, %c0_i32_0 : i32, i32
  }
  func.func @transform_1(%arg0: i32, %arg1: i32) -> (i32, i32) {
    %c1_i32 = arith.constant 1 : i32
    %0 = arith.muli %arg0, %c1_i32 : i32
    %1 = arith.addi %0, %arg1 : i32
    %c0_i32 = arith.constant 0 : i32
    %2 = arith.minsi %1, %c0_i32 : i32
    %c0_i32_0 = arith.constant 0 : i32
    %c0_i32_1 = arith.constant 0 : i32
    return %2, %c0_i32_0 : i32, i32
  }
  func.func @transform_2(%arg0: i32, %arg1: i32) -> (i32, i32) {
    %c1_i32 = arith.constant 1 : i32
    %0 = arith.muli %arg0, %c1_i32 : i32
    %1 = arith.addi %0, %arg1 : i32
    %c0_i32 = arith.constant 0 : i32
    %2 = arith.minsi %1, %c0_i32 : i32
    %c0_i32_0 = arith.constant 0 : i32
    %c0_i32_1 = arith.constant 0 : i32
    return %2, %c0_i32_0 : i32, i32
  }
  func.func @transform_3(%arg0: i32, %arg1: i32) -> (i32, i32, i32) {
    %c0_i32 = arith.constant 0 : i32
    %c0_i32_0 = arith.constant 0 : i32
    %c0_i32_1 = arith.constant 0 : i32
    return %arg0, %c0_i32, %c0_i32_0 : i32, i32, i32
  }
}

</mosaic_0001>

<llo_original>
// kernel: tpu_custom_call.1
$region0: #{tpu_custom_call.1}
  #allocation0 [shape = 'u32[]', space=smem, size = 0x4, offset = 0x4, fixed_abs, tag = 'smem constant byte address 0x4 - core index']
  #allocation1 [shape = 'u32[144,128]{1,0:T(1,128)}', space=vmem, size = 0x12000, scoped, tag = 'internal scratch']
  %s0 = inlined_call_operand.hbm [shape: f32[8,256], index: 0, kind: input, shape index: {}]
  %s1 = inlined_call_operand.hbm [shape: f32[8,256], index: 1, kind: input, shape index: {}]
  %s2 = inlined_call_operand.vmem [shape: f32[8,1], index: 2, kind: input, shape index: {}]
  %s3 = inlined_call_operand.hbm [shape: f32[1,8,256], index: 3, kind: output, shape index: {}]
  %s4 = sld [smem:[#allocation0]]
  $region38: #{tpu_custom_call.1} parent=0
    _
  %s6 = ssub.s32 1, %s4
  %s7 = scalar_select 0, %s6, %s4
  $region1: #{tpu_custom_call.1} parent=0
    #allocation2 [shape = 'u8[8192]{0}', space=vmem, size = 0x2000, scoped, tag = 'input window, operand 0, single buffered']
    #allocation3 [shape = 's32[1]{0}', space=sflag, size = 0x4, scoped, tag = 'scoped memory for tpu_custom_call.1']
    #allocation4 [shape = 's32[1]{0}', space=sflag, size = 0x4, scoped, tag = 'scoped memory for tpu_custom_call.1']
    #allocation5 [shape = 'u8[8192]{0}', space=vmem, size = 0x2000, scoped, tag = 'input window, operand 1, single buffered']
    #allocation6 [shape = 's32[1]{0}', space=sflag, size = 0x4, scoped, tag = 'scoped memory for tpu_custom_call.1']
    #allocation7 [shape = 'u8[8192]{0}', space=vmem, size = 0x2000, scoped, tag = 'output window, operand 0, single buffered']
    %8 = vsyncpa [#allocation3], 0
    %9 = vsyncpa [#allocation6], 0
    %10 = vsyncpa [#allocation4], 0
    // Predicated region
    $region2: #{tpu_custom_call.1} parent=1 // pred_check
      _
    $region3: #{tpu_custom_call.1} parent=1 // pred_check_branch
      %12 = sbr.rel (0) target = $region5
    $region4: #{tpu_custom_call.1} parent=1 // pred_region
      %s13 = sadd.s32 0, 0
      %p14 = scmp.lt.s32.totalorder %s13, 0
      %s15 = scalar_select %p14, %s13, 0
      %s17 = ssub.s32 256, 256
      %18 = vsyncadd [#allocation3], %s17
      %s19 = smul.addr %s15, 2
      %s20 = smul.addr %s19, 128
      %s21 = scalar_lea.hbm %s0, %s20
      %s23 = sshll.u32 [#allocation2], 4
      %s24 = int_to_ptr.vmem [resolvable:$true] %s23
      %26 = dma.hbm_to_vmem [thread:$0]  %s21, 256, %s24, [#allocation3]
    $region5: #{tpu_custom_call.1} parent=1 // pred_fallthru
      _
    // Predicated region
    $region6: #{tpu_custom_call.1} parent=1 // pred_check
      _
    $region7: #{tpu_custom_call.1} parent=1 // pred_check_branch
      %28 = sbr.rel (0) target = $region9
    $region8: #{tpu_custom_call.1} parent=1 // pred_region
      %s29 = sadd.s32 0, 0
      %p30 = scmp.lt.s32.totalorder %s29, 0
      %s31 = scalar_select %p30, %s29, 0
      %s33 = ssub.s32 256, 256
      %34 = vsyncadd [#allocation6], %s33
      %s35 = smul.addr %s31, 2
      %s36 = smul.addr %s35, 128
      %s37 = scalar_lea.hbm %s1, %s36
      %s39 = sshll.u32 [#allocation5], 4
      %s40 = int_to_ptr.vmem [resolvable:$true] %s39
      %42 = dma.hbm_to_vmem [thread:$0]  %s37, 256, %s40, [#allocation6]
    $region9: #{tpu_custom_call.1} parent=1 // pred_fallthru
      _
    // Predicated region
    $region10: #{tpu_custom_call.1} parent=1 // pred_check
      _
    $region11: #{tpu_custom_call.1} parent=1 // pred_check_branch
      %44 = sbr.rel (0) target = $region13
    $region12: #{tpu_custom_call.1} parent=1 // pred_region
      %s45 = sadd.s32 0, 0
      %p46 = scmp.lt.s32.totalorder %s45, 0
      %s47 = scalar_select %p46, %s45, 0
      %p48 = scmp.lt.s32.totalorder %s47, 0
      %s49 = scalar_select %p48, %s47, 0
      %s50 = smul.addr %s49, 8
      %s51 = scalar_lea.vmem %s2, %s50
      %s52 = sadd.s32 0, 0
      %p53 = scmp.lt.s32.totalorder %s52, 0
      %s54 = scalar_select %p53, %s52, 0
    $region13: #{tpu_custom_call.1} parent=1 // pred_fallthru
      _
    // Predicated region
    $region14: #{tpu_custom_call.1} parent=1 // pred_check
      _
    $region15: #{tpu_custom_call.1} parent=1 // pred_check_branch
      %56 = sbr.rel (0) target = $region17
    $region16: #{tpu_custom_call.1} parent=1 // pred_region
      %57 = dma.done [#allocation3], 256
    $region17: #{tpu_custom_call.1} parent=1 // pred_fallthru
      _
    // Predicated region
    $region18: #{tpu_custom_call.1} parent=1 // pred_check
      _
    $region19: #{tpu_custom_call.1} parent=1 // pred_check_branch
      %59 = sbr.rel (0) target = $region21
    $region20: #{tpu_custom_call.1} parent=1 // pred_region
      %60 = dma.done [#allocation6], 256
    $region21: #{tpu_custom_call.1} parent=1 // pred_fallthru
      _
    %s61 = sadd.s32 0, 0
    %p62 = scmp.lt.s32.totalorder %s61, 0
    %s63 = scalar_select %p62, %s61, 0
    %p64 = scmp.lt.s32.totalorder %s63, 0
    %s65 = scalar_select %p64, %s63, 0
    %s66 = smul.addr %s65, 8
    %s67 = scalar_lea.vmem %s2, %s66
    %s68 = sadd.s32 0, 0
    %p69 = scmp.lt.s32.totalorder %s68, 0
    %s70 = scalar_select %p69, %s68, 0
    %s71 = sadd.s32 0, 0
    %p72 = scmp.lt.s32.totalorder %s71, 0
    %s73 = scalar_select %p72, %s71, 0
    %s74 = sadd.s32 0, 0
    %p75 = scmp.lt.s32.totalorder %s74, 0
    %s76 = scalar_select %p75, %s74, 0
    %p77 = scmp.lt.s32.totalorder %s76, 0
    %s78 = scalar_select %p77, %s76, 0
    %s79 = smul.addr %s78, 8
    %s80 = scalar_lea.vmem %s2, %s79
    %s81 = sadd.s32 0, 0
    %p82 = scmp.lt.s32.totalorder %s81, 0
    %s83 = scalar_select %p82, %s81, 0
    %s84 = sadd.s32 0, 0
    %s85 = smul.u32 %s84, 8
    %p86 = scmp.eq.s32.totalorder 0, 0
    // Predicated region
    $region22: #{tpu_custom_call.1} parent=1 // pred_check
      %p87 = pneg %p86
    $region23: #{tpu_custom_call.1} parent=1 // pred_check_branch
      %89 = sbr.rel (%p87) target = $region25
    $region24: #{tpu_custom_call.1} parent=1 // pred_region
      %90 = vst [vmem:[#allocation7] sm:$0xff] 0.0
      %91 = vst [vmem:[#allocation7 + $0x8] sm:$0xff] 0.0
    $region25: #{tpu_custom_call.1} parent=1 // pred_fallthru
      _
    %p92 = scmp.lt.s32.totalorder %s85, 8
    // Predicated region
    $region26: #{tpu_custom_call.1} parent=1 // pred_check
      %p93 = pneg %p92
    $region27: #{tpu_custom_call.1} parent=1 // pred_check_branch
      %95 = sbr.rel (%p93) target = $region29
    $region28: #{tpu_custom_call.1} parent=1 // pred_region
      %s96 = smul.u32 0, 2
      %s97 = smul.addr %s96, 8
      %s98 = scalar_lea.vmem [#allocation2], %s97
      %v99 = vld [vmem:[%s98] sm:$0xff]
      %v100 = vld [vmem:[%s98 + $0x8] sm:$0xff]
      %s101 = smul.addr %s96, 8
      %s102 = scalar_lea.vmem [#allocation5], %s101
      %v103 = vld [vmem:[%s102] sm:$0xff]
      %v104 = vld [vmem:[%s102 + $0x8] sm:$0xff]
      %v105 = vsub.f32 %v99, %v103
      %v106 = vsub.f32 %v100, %v104
      %v107 = vld [vmem:[%s80] sm:$0xff]
      %109 = vset.pattern.permute.xlu0 0
      %110 = vperm.xlu0 %109, %v107
      %v111 = vpop.permute.xlu0 %110
      %v113 = vmul.f32 %v105, %v111
      %v114 = vmul.f32 %v106, %v111
      %s115 = sadd.s32 %s85, 0
      %v116 = vlaneseq
      %v117 = vshrl.u32 %v116, 7
      %v118 = vstv %s115
      %v119 = vadd.s32 %v118, %v117
      %vm120 = vcmp.lt.s32.totalorder %v119, 8
      %v121 = vmul.f32 %v113, %v113
      %v122 = vmul.f32 %v114, %v114
      %v123 = vsel %vm120, 1, 0
      %vm124 = vcmp.eq.s32.totalorder %v123, 1
      %v125 = vsel %vm124, %v121, 0.0
      %v126 = vsel %vm124, %v122, 0.0
      %v127 = vadd.f32 %v125, 0.0
      %v128 = vadd.f32 %v126, 0.0
      %v129 = vadd.f32 %v127, 0.0
      %v130 = vadd.f32 %v128, 0.0
      %v131 = vld [vmem:[#allocation7] sm:$0xff]
      %v132 = vld [vmem:[#allocation7 + $0x8] sm:$0xff]
      %v133 = vadd.f32 %v131, %v129
      %v134 = vadd.f32 %v132, %v130
      %135 = vst [vmem:[#allocation7] sm:$0xff] %v133
      %136 = vst [vmem:[#allocation7 + $0x8] sm:$0xff] %v134
    $region29: #{tpu_custom_call.1} parent=1 // pred_fallthru
      _
    // Predicated region
    $region30: #{tpu_custom_call.1} parent=1 // pred_check
      _
    $region31: #{tpu_custom_call.1} parent=1 // pred_check_branch
      %138 = sbr.rel (0) target = $region33
    $region32: #{tpu_custom_call.1} parent=1 // pred_region
      %s140 = ssub.s32 256, 256
      %141 = vsyncadd [#allocation4], %s140
      %s143 = sshll.u32 [#allocation7], 4
      %s144 = int_to_ptr.vmem [resolvable:$true] %s143
      %146 = dma.vmem_to_hbm [thread:$0]  %s144, 256, %s3, [#allocation4]
    $region33: #{tpu_custom_call.1} parent=1 // pred_fallthru
      _
    // Predicated region
    $region34: #{tpu_custom_call.1} parent=1 // pred_check
      _
    $region35: #{tpu_custom_call.1} parent=1 // pred_check_branch
      %148 = sbr.rel (0) target = $region37
    $region36: #{tpu_custom_call.1} parent=1 // pred_region
      %149 = dma.done [#allocation4], 256
    $region37: #{tpu_custom_call.1} parent=1 // pred_fallthru
      _
    %150 = vsyncpa [#allocation3], 1
    %151 = vsyncpa [#allocation6], 1
    %152 = vsyncpa [#allocation4], 1

</llo_original>
